<compile_context>
chip_gen: v5e
topology: v5e:2x2
jax: 0.10.0
libtpu: 0.0.40
codegen_flags: <defaults>
</compile_context>

<pallas_src>
import functools

import jax
import jax.numpy as jnp
from jax.experimental import pallas as pl
from jax.experimental.pallas import tpu as pltpu


def _mean_kernel(seq_ref, out_ref, acc_ref, *, inv_n):
    # seq_ref: (B, TN, H), out_ref: (B, H), acc_ref: (B, H) f32 scratch
    n = pl.program_id(0)

    @pl.when(n == 0)
    def _():
        acc_ref[...] = jnp.zeros_like(acc_ref)

    acc_ref[...] += jnp.sum(seq_ref[...].astype(jnp.float32), axis=1)

    @pl.when(n == pl.num_programs(0) - 1)
    def _():
        out_ref[...] = (acc_ref[...] * jnp.float32(inv_n)).astype(out_ref.dtype)


def _masked_kernel(inv_denom_ref, seq_ref, msk_ref, out_ref, acc_ref):
    # inv_denom_ref: (1, 1) f32 in SMEM (precomputed 1 / sum(msk))
    # seq_ref: (B, TN, H), msk_ref: (B, TN, 1), out_ref: (B, H), acc_ref: (B, H) f32
    n = pl.program_id(0)

    @pl.when(n == 0)
    def _():
        acc_ref[...] = jnp.zeros_like(acc_ref)

    seq = seq_ref[...].astype(jnp.float32)
    msk = msk_ref[...].astype(jnp.float32)  # (B, TN, 1): lane-broadcast over H
    acc_ref[...] += jnp.sum(seq * msk, axis=1)

    @pl.when(n == pl.num_programs(0) - 1)
    def _():
        out_ref[...] = (acc_ref[...] * inv_denom_ref[0, 0]).astype(out_ref.dtype)


def _pick_tile_n(B, N, H, itemsize):
    """Pick an N-tile: ~2 MiB per seq block (double-buffered fits the scoped
    VMEM limit on v5e/v6e/v7x), multiple of the sublane packing, dividing N."""
    packing = max(1, 4 // max(1, itemsize))   # f32 -> 1, bf16 -> 2, int8 -> 4
    sub = 8 * packing
    target_bytes = 2 * 1024 * 1024
    per_row = max(1, B * H * itemsize)
    tn = min(N, max(sub, target_bytes // per_row))
    if tn >= N:
        return N
    tn = max(sub, (tn // sub) * sub)
    # The reduction must not see padded garbage rows: shrink to a sublane-aligned
    # divisor of N, else fall back to the full extent (always legal).
    while tn > sub and N % tn != 0:
        tn -= sub
    if N % tn != 0:
        return N
    return tn


def avg_readout(seq, msk=None):
    """Pallas TPU implementation of DGI AvgReadout.forward(seq, msk)."""
    B, N, H = seq.shape
    itemsize = jnp.dtype(seq.dtype).itemsize
    tn = _pick_tile_n(B, N, H, itemsize)
    num_n = N // tn

    out_shape = jax.ShapeDtypeStruct((B, H), seq.dtype)
    out_spec = pl.BlockSpec((B, H), lambda n: (0, 0))
    seq_spec = pl.BlockSpec((B, tn, H), lambda n: (0, n, 0))
    scratch = [pltpu.VMEM((B, H), jnp.float32)]
    compiler_params = pltpu.CompilerParams(dimension_semantics=("arbitrary",))
    out_bytes = B * H * itemsize
    seq_bytes = B * N * H * itemsize
    # TODO(synk): for tiny H (< 128) the output store is lane-masked; a lane-dense
    # (padded-H) layout in the wrapper would help, but H is kept as-is for fidelity.

    if msk is None:
        kernel = functools.partial(_mean_kernel, inv_n=1.0 / N)
        return pl.pallas_call(
            kernel,
            out_shape=out_shape,
            grid=(num_n,),
            in_specs=[seq_spec],
            out_specs=out_spec,
            scratch_shapes=scratch,
            compiler_params=compiler_params,
            cost_estimate=pl.CostEstimate(
                flops=B * N * H,
                transcendentals=0,
                bytes_accessed=seq_bytes + out_bytes,
            ),
        )(seq)

    # Masked path: mask laid out as (B, N, 1); global denominator hoisted out.
    msk3 = msk.reshape(B, N, 1)
    inv_denom = (1.0 / jnp.sum(msk.astype(jnp.float32))).reshape(1, 1)
    msk_bytes = B * N * jnp.dtype(msk3.dtype).itemsize
    return pl.pallas_call(
        _masked_kernel,
        out_shape=out_shape,
        grid=(num_n,),
        in_specs=[
            pl.BlockSpec(memory_space=pltpu.MemorySpace.SMEM),   # inv_denom scalar
            seq_spec,
            pl.BlockSpec((B, tn, 1), lambda n: (0, n, 0)),       # mask tile
        ],
        out_specs=out_spec,
        scratch_shapes=scratch,
        compiler_params=compiler_params,
        cost_estimate=pl.CostEstimate(
            flops=2 * B * N * H,
            transcendentals=0,
            bytes_accessed=seq_bytes + msk_bytes + out_bytes,
        ),
    )(inv_denom, seq, msk3)


if __name__ == "__main__":
    key = jax.random.PRNGKey(0)
    k_seq, k_msk = jax.random.split(key)

    B, N, H = 2, 8, 32
    seq = jax.random.normal(k_seq, (B, N, H), dtype=jnp.float32)
    msk = (jax.random.uniform(k_msk, (B, N)) > 0.3).astype(jnp.float32)

    # masked path
    out_masked = avg_readout(seq, msk)
    out_masked = jax.block_until_ready(out_masked)
    ref_masked = jnp.sum(seq * msk[:, :, None], axis=1) / jnp.sum(msk)
    assert out_masked.shape == (B, H)
    assert jnp.allclose(out_masked, ref_masked, atol=1e-5, rtol=1e-5)

    # msk=None path (mean over node axis)
    out_mean = avg_readout(seq, None)
    out_mean = jax.block_until_ready(out_mean)
    ref_mean = jnp.mean(seq, axis=1)
    assert out_mean.shape == (B, H)
    assert jnp.allclose(out_mean, ref_mean, atol=1e-5, rtol=1e-5)

    print("KERNEL_OK")
</pallas_src>

<mosaic_0001>
module attributes {stable_mosaic.version = 11 : i64} {
  func.func @_masked_kernel(%arg0: i32, %arg1: memref<1x1xf32, #tpu.memory_space<smem>>, %arg2: memref<2x8x32xf32, #tpu.memory_space<vmem>>, %arg3: memref<2x8x1xf32, #tpu.memory_space<vmem>>, %arg4: memref<2x32xf32, #tpu.memory_space<vmem>>, %arg5: memref<2x32xf32, #tpu.memory_space<vmem>>) attributes {dimension_semantics = [#tpu.dimension_semantics<arbitrary>], iteration_bounds = array<i64: 1>, scalar_prefetch = 0 : i64, scratch_operands = 1 : i64, tpu.core_type = #tpu.core_type<tc>, window_params = [{transform_indices = @transform_0, window_bounds = array<i64: 1, 1>}, {transform_indices = @transform_1, window_bounds = array<i64: 2, 8, 32>}, {transform_indices = @transform_2, window_bounds = array<i64: 2, 8, 1>}, {pipeline_mode = #tpu.pipeline_mode<synchronous>, transform_indices = @transform_3, window_bounds = array<i64: 2, 32>}]} {
    %c0_i32 = arith.constant 0 : i32
    %0 = arith.cmpi eq, %arg0, %c0_i32 : i32
    %1 = arith.extui %0 : i1 to i32
    %c0_i32_0 = arith.constant 0 : i32
    %2 = arith.cmpi ne, %1, %c0_i32_0 : i32
    scf.if %2 {
      %cst_12 = arith.constant 0.000000e+00 : f32
      %14 = vector.broadcast %cst_12 : f32 to vector<2x32xf32>
      %c0_13 = arith.constant 0 : index
      %c0_14 = arith.constant 0 : index
      %15 = vector.load %arg5[%c0_13, %c0_14] : memref<2x32xf32, #tpu.memory_space<vmem>>, vector<2x32xf32>
      tpu.vector_store %arg5[%c0_13, %c0_14], %14 {strides = array<i32>} : memref<2x32xf32, #tpu.memory_space<vmem>>, vector<2x32xf32>,
    } else {
    }
    %c0 = arith.constant 0 : index
    %c0_1 = arith.constant 0 : index
    %c0_2 = arith.constant 0 : index
    %3 = vector.load %arg2[%c0, %c0_1, %c0_2] : memref<2x8x32xf32, #tpu.memory_space<vmem>>, vector<2x8x32xf32>
    %c0_3 = arith.constant 0 : index
    %c0_4 = arith.constant 0 : index
    %c0_5 = arith.constant 0 : index
    %4 = vector.load %arg3[%c0_3, %c0_4, %c0_5] : memref<2x8x1xf32, #tpu.memory_space<vmem>>, vector<2x8x1xf32>
    %c0_6 = arith.constant 0 : index
    %c0_7 = arith.constant 0 : index
    %5 = vector.load %arg5[%c0_6, %c0_7] : memref<2x32xf32, #tpu.memory_space<vmem>>, vector<2x32xf32>
    %6 = vector.broadcast %4 : vector<2x8x1xf32> to vector<2x8x32xf32>
    %7 = arith.mulf %3, %6 : vector<2x8x32xf32>
    %cst = arith.constant dense<0.000000e+00> : vector<2x32xf32>
    %8 = vector.multi_reduction <add>, %7, %cst [1] : vector<2x8x32xf32> to vector<2x32xf32>
    %9 = arith.addf %5, %8 : vector<2x32xf32>
    %c0_8 = arith.constant 0 : index
    %c0_9 = arith.constant 0 : index
    %10 = vector.load %arg5[%c0_8, %c0_9] : memref<2x32xf32, #tpu.memory_space<vmem>>, vector<2x32xf32>
    tpu.vector_store %arg5[%c0_8, %c0_9], %9 {strides = array<i32>} : memref<2x32xf32, #tpu.memory_space<vmem>>, vector<2x32xf32>,
    %c0_i32_10 = arith.constant 0 : i32
    %11 = arith.cmpi eq, %arg0, %c0_i32_10 : i32
    %12 = arith.extui %11 : i1 to i32
    %c0_i32_11 = arith.constant 0 : i32
    %13 = arith.cmpi ne, %12, %c0_i32_11 : i32
    scf.if %13 {
      %c0_12 = arith.constant 0 : index
      %c0_13 = arith.constant 0 : index
      %14 = vector.load %arg5[%c0_12, %c0_13] : memref<2x32xf32, #tpu.memory_space<vmem>>, vector<2x32xf32>
      %c0_14 = arith.constant 0 : index
      %c0_15 = arith.constant 0 : index
      %15 = memref.load %arg1[%c0_14, %c0_15] : memref<1x1xf32, #tpu.memory_space<smem>>
      %16 = vector.broadcast %15 : f32 to vector<2x32xf32>
      %17 = arith.mulf %14, %16 : vector<2x32xf32>
      %c0_16 = arith.constant 0 : index
      %c0_17 = arith.constant 0 : index
      %18 = vector.load %arg4[%c0_16, %c0_17] : memref<2x32xf32, #tpu.memory_space<vmem>>, vector<2x32xf32>
      tpu.vector_store %arg4[%c0_16, %c0_17], %17 {strides = array<i32>} : memref<2x32xf32, #tpu.memory_space<vmem>>, vector<2x32xf32>,
    } else {
    }
    return
  }
  func.func @transform_0(%arg0: i32) -> (i32, i32) {
    %c0_i32 = arith.constant 0 : i32
    %c0_i32_0 = arith.constant 0 : i32
    %c0_i32_1 = arith.constant 0 : i32
    return %c0_i32, %c0_i32_0 : i32, i32
  }
  func.func @transform_1(%arg0: i32) -> (i32, i32, i32) {
    %c0_i32 = arith.constant 0 : i32
    %c0_i32_0 = arith.constant 0 : i32
    %c0_i32_1 = arith.constant 0 : i32
    return %c0_i32, %arg0, %c0_i32_0 : i32, i32, i32
  }
  func.func @transform_2(%arg0: i32) -> (i32, i32, i32) {
    %c0_i32 = arith.constant 0 : i32
    %c0_i32_0 = arith.constant 0 : i32
    %c0_i32_1 = arith.constant 0 : i32
    return %c0_i32, %arg0, %c0_i32_0 : i32, i32, i32
  }
  func.func @transform_3(%arg0: i32) -> (i32, i32) {
    %c0_i32 = arith.constant 0 : i32
    %c0_i32_0 = arith.constant 0 : i32
    %c0_i32_1 = arith.constant 0 : i32
    return %c0_i32, %c0_i32_0 : i32, i32
  }
}

</mosaic_0001>

<llo_original>
// kernel: tpu_custom_call.1
$region0: #{tpu_custom_call.1}
  #allocation0 [shape = 'u32[]', space=smem, size = 0x4, offset = 0x4, fixed_abs, tag = 'smem constant byte address 0x4 - core index']
  #allocation1 [shape = 'u32[72,128]{1,0:T(1,128)}', space=vmem, size = 0x9000, scoped, tag = 'internal scratch']
  #allocation2 [shape = 'f32[2,32]{1,0:T(2,128)}', space=vmem, size = 0x400, scoped, tag = 'scratch operand']
  #allocation3 [shape = 'f32[1,1]{1,0:T(1,128)S(6)}', space=smem, size = 0x200, scoped, tag = 'scoped memory for tpu_custom_call.1']
  %s0 = inlined_call_operand.<no memory space> [shape: f32[1,1], index: 0, kind: input, shape index: {}]
  %s1 = inlined_call_operand.vmem [shape: f32[2,8,32], index: 1, kind: input, shape index: {}]
  %s2 = inlined_call_operand.vmem [shape: f32[2,8,1], index: 2, kind: input, shape index: {}]
  %s3 = inlined_call_operand.hbm [shape: f32[2,32], index: 3, kind: output, shape index: {}]
  %s4 = sld [smem:[#allocation0]]
  $region30: #{tpu_custom_call.1} parent=0
    _
  %s6 = ssub.s32 1, %s4
  %s7 = scalar_select 0, %s6, %s4
  %8 = sst [smem:[#allocation3]] %s0
  $region1: #{tpu_custom_call.1} parent=0
    #allocation4 [shape = 'u8[1024]{0}', space=vmem, size = 0x400, scoped, tag = 'output window, operand 0, single buffered']
    #allocation5 [shape = 's32[1]{0}', space=sflag, size = 0x4, scoped, tag = 'scoped memory for tpu_custom_call.1']
    %9 = vsyncpa [#allocation5], 0
    // Predicated region
    $region2: #{tpu_custom_call.1} parent=1 // pred_check
      _
    $region3: #{tpu_custom_call.1} parent=1 // pred_check_branch
      %11 = sbr.rel (0) target = $region5
    $region4: #{tpu_custom_call.1} parent=1 // pred_region
      _
    $region5: #{tpu_custom_call.1} parent=1 // pred_fallthru
      _
    // Predicated region
    $region6: #{tpu_custom_call.1} parent=1 // pred_check
      _
    $region7: #{tpu_custom_call.1} parent=1 // pred_check_branch
      %13 = sbr.rel (0) target = $region9
    $region8: #{tpu_custom_call.1} parent=1 // pred_region
      _
    $region9: #{tpu_custom_call.1} parent=1 // pred_fallthru
      _
    // Predicated region
    $region10: #{tpu_custom_call.1} parent=1 // pred_check
      _
    $region11: #{tpu_custom_call.1} parent=1 // pred_check_branch
      %15 = sbr.rel (0) target = $region13
    $region12: #{tpu_custom_call.1} parent=1 // pred_region
      _
    $region13: #{tpu_custom_call.1} parent=1 // pred_fallthru
      _
    %p16 = scmp.eq.s32.totalorder 0, 0
    // Predicated region
    $region14: #{tpu_custom_call.1} parent=1 // pred_check
      %p17 = pneg %p16
    $region15: #{tpu_custom_call.1} parent=1 // pred_check_branch
      %19 = sbr.rel (%p17) target = $region17
    $region16: #{tpu_custom_call.1} parent=1 // pred_region
      %vm20 = vcmask 254976
      %21 = vst.msk [vmem:[#allocation2] sm:$0x3] %vm20, 0.0
    $region17: #{tpu_custom_call.1} parent=1 // pred_fallthru
      _
    %v22 = vld [vmem:[%s1] sm:$0xff]
    %v23 = vld [vmem:[%s1 + $0x8] sm:$0xff]
    %v24 = vld [vmem:[%s2] sm:$0xff]
    %v25 = vld [vmem:[%s2 + $0x8] sm:$0xff]
    %v26 = vld [vmem:[#allocation2] sm:$0x3]
    %28 = vset.pattern.permute.xlu0 0
    %29 = vperm.xlu0 %28, %v24
    %v30 = vpop.permute.xlu0 %29
    %33 = vset.pattern.permute.xlu0 0
    %34 = vperm.xlu0 %33, %v25
    %v35 = vpop.permute.xlu0 %34
    %v37 = vmul.f32 %v22, %v30
    %v38 = vmul.f32 %v23, %v35
    %vm39 = vcmask 261120
    %v40 = vsel %vm39, %v37, 0.0
    %v41 = vrot.slane %v40, 4
    %v42 = vadd.f32 %v40, %v41
    %v43 = vrot.slane %v42, 2
    %v44 = vadd.f32 %v42, %v43
    %v45 = vrot.slane %v44, 1
    %v46 = vadd.f32 %v44, %v45
    %v47 = vsel %vm39, %v38, 0.0
    %v48 = vrot.slane %v47, 4
    %v49 = vadd.f32 %v47, %v48
    %v50 = vrot.slane %v49, 2
    %v51 = vadd.f32 %v49, %v50
    %v52 = vrot.slane %v51, 1
    %v53 = vadd.f32 %v51, %v52
    %vm56 = vcmask 1041409
    %v57 = vsel %vm56, %v53, %v46
    %v59 = vadd.f32 %v26, %v57
    %vm60 = vcmask 254976
    %61 = vst.msk [vmem:[#allocation2] sm:$0x3] %vm60, %v59
    // Predicated region
    $region18: #{tpu_custom_call.1} parent=1 // pred_check
      %p62 = pneg %p16
    $region19: #{tpu_custom_call.1} parent=1 // pred_check_branch
      %64 = sbr.rel (%p62) target = $region21
    $region20: #{tpu_custom_call.1} parent=1 // pred_region
      %v65 = vld [vmem:[#allocation2] sm:$0x3]
      %s66 = sld [smem:[#allocation3]]
      %v67 = vstv %s66
      %v68 = vmul.f32 %v65, %v67
      %69 = vst.msk [vmem:[#allocation4] sm:$0x3] %vm60, %v68
    $region21: #{tpu_custom_call.1} parent=1 // pred_fallthru
      _
    // Predicated region
    $region22: #{tpu_custom_call.1} parent=1 // pred_check
      _
    $region23: #{tpu_custom_call.1} parent=1 // pred_check_branch
      %71 = sbr.rel (0) target = $region25
    $region24: #{tpu_custom_call.1} parent=1 // pred_region
      %73 = vsyncadd [#allocation5], 0
      %s75 = sshll.u32 [#allocation4], 4
      %s76 = int_to_ptr.vmem [resolvable:$true] %s75
      %s77 = sshll.u32 %s3, 4
      %s78 = int_to_ptr.hbm [resolvable:$true] %s77
      %80 = dma.vmem_to_hbm [thread:$0]  %s76, 32, %s78, [#allocation5]
    $region25: #{tpu_custom_call.1} parent=1 // pred_fallthru
      _
    // Predicated region
    $region26: #{tpu_custom_call.1} parent=1 // pred_check
      _
    $region27: #{tpu_custom_call.1} parent=1 // pred_check_branch
      %82 = sbr.rel (0) target = $region29
    $region28: #{tpu_custom_call.1} parent=1 // pred_region
      %84 = dma.done [#allocation5], 32
    $region29: #{tpu_custom_call.1} parent=1 // pred_fallthru
      _
    %85 = vsyncpa [#allocation5], 1

</llo_original>
